<compile_context>
chip_gen: v7x
topology: tpu7x:2x2x1
jax: 0.10.0
libtpu: 0.0.40
codegen_flags: <defaults>
</compile_context>

<pallas_src>
import functools

import jax
import jax.numpy as jnp
from jax import lax
from jax.experimental import pallas as pl
from jax.experimental.pallas import tpu as pltpu


def _round_up(x, m):
    return ((x + m - 1) // m) * m


def _sepconv_kernel(xa_ref, xb_ref, w_ref, b_ref, o_ref, *, k, wp):
    # xa_ref : (1, Cinp, TP)        current flat-spatial tile.
    # xb_ref : (1, Cinp, HB)        halo lanes taken from the next tile.
    # w_ref  : (Cout, k*k*Cinp)     folded depthwise*pointwise weights, flattened.
    # b_ref  : (Cout, 1)            folded bias.
    # o_ref  : (1, Cout, TP)        lane-dense output tile.
    tp = o_ref.shape[-1]

    # Current tile plus (small) halo, concatenated on the lane axis (aligned).
    x2 = jnp.concatenate([xa_ref[0], xb_ref[0]], axis=-1)      # (Cinp, TP+HB)

    # Stack the k*k lane-shifted tap windows along sublanes; every piece has a
    # multiple-of-8 sublane count (Cinp % 8 == 0) so this is an aligned,
    # near-free vreg relabeling.  Feeds one fused MXU matmul.
    taps = []
    for di in range(k):
        for dj in range(k):
            off = di * wp + dj                                  # static lane offset
            taps.append(x2[:, off:off + tp])                    # (Cinp, TP)
    x_stack = jnp.concatenate(taps, axis=0)                     # (k*k*Cinp, TP)

    acc = jnp.dot(w_ref[...], x_stack,                          # MXU: (Cout,kkC)@(kkC,TP)
                  preferred_element_type=jnp.float32)
    o_ref[0] = (acc + b_ref[...]).astype(o_ref.dtype)


def separable_conv2d(x, dw_w, dw_b, pw_w, pw_b, *, kernel_size, stride=1,
                     padding=0, tile_p=512):
    """x: (N, Cin, H, W) float32 (PyTorch NCHW). Returns (N, Cout, Ho, Wo)."""
    N, Cin, H, W = x.shape
    k = kernel_size
    Cout = pw_w.shape[-1]

    hp, wp = H + 2 * padding, W + 2 * padding
    ho1, wo1 = hp - k + 1, wp - k + 1           # stride-1 (dense) output extent
    ho = (hp - k) // stride + 1
    wo = (wp - k) // stride + 1

    # ---- flat-spatial tiling of the dense stride-1 output map --------------
    p_needed = (ho1 - 1) * wp + wo1             # flat positions holding valid outputs
    halo = (k - 1) * (wp + 1)                   # largest tap offset
    hb = _round_up(max(halo, 1), 128)           # halo block lanes (multiple of 128)

    # One spatial tile when it fits the budget (fewer ~0.35us grid steps);
    # otherwise the largest multiple of hb that fits tile_p.  tp % hb == 0 is
    # required so the halo BlockSpec (block size hb) can address offset (pt+1)*tp.
    tp_single = _round_up(p_needed, hb)
    budget = max(tile_p, hb)
    tp = tp_single if tp_single <= budget else max(hb, (budget // hb) * hb)
    P = _round_up(p_needed, tp)
    n_pt = P // tp
    rat = tp // hb                              # halo blocks per main tile

    # Single pad: conv padding + channel pad to a multiple of 8 sublanes +
    # enough bottom rows so the last tile's halo block stays in bounds.
    cinp = _round_up(Cin, 8)
    flat_needed = P + hb
    extra_rows = max(0, -(-(flat_needed - hp * wp) // wp))
    x = jnp.pad(x, ((0, 0), (0, cinp - Cin),
                    (padding, padding + extra_rows), (padding, padding)))
    x_flat = x.reshape(N, cinp, -1)             # (N, Cinp, flat_len): free reshape
    flat_len = x_flat.shape[-1]
    assert flat_len >= flat_needed, (flat_len, flat_needed)

    # ---- fold depthwise into pointwise + flatten (wrapper side, tiny) -------
    w_comb = dw_w.reshape(k * k, Cin, 1) * pw_w[None]           # (k*k, Cin, Cout)
    if cinp != Cin:
        w_comb = jnp.pad(w_comb, ((0, 0), (0, cinp - Cin), (0, 0)))
    w_flat = jnp.transpose(w_comb, (2, 0, 1)).reshape(Cout, k * k * cinp)
    b_comb = (dw_b @ pw_w + pw_b).reshape(Cout, 1)

    kernel = functools.partial(_sepconv_kernel, k=k, wp=wp)

    cost = pl.CostEstimate(
        flops=2 * N * Cout * k * k * cinp * P,
        transcendentals=0,
        bytes_accessed=4 * (N * n_pt * cinp * (tp + hb) + N * Cout * P
                            + int(w_flat.size) + int(b_comb.size)))

    out_flat = pl.pallas_call(
        kernel,
        out_shape=jax.ShapeDtypeStruct((N, Cout, P), x.dtype),
        grid_spec=pltpu.PrefetchScalarGridSpec(
            num_scalar_prefetch=0,
            grid=(N, n_pt),
            in_specs=[
                pl.BlockSpec((1, cinp, tp), lambda n, pt: (n, 0, pt)),   # tile
                pl.BlockSpec((1, cinp, hb),
                             lambda n, pt: (n, 0, (pt + 1) * rat)),      # halo (hb lanes)
                pl.BlockSpec((Cout, k * k * cinp), lambda n, pt: (0, 0)),
                pl.BlockSpec((Cout, 1), lambda n, pt: (0, 0)),
            ],
            out_specs=pl.BlockSpec((1, Cout, tp), lambda n, pt: (n, 0, pt)),
        ),
        compiler_params=pltpu.CompilerParams(
            dimension_semantics=("parallel", "parallel"),
            vmem_limit_bytes=32 * 1024 * 1024),
        cost_estimate=cost,
    )(x_flat, x_flat, w_flat, b_comb)

    # ---- layout plumbing back to (N, Cout, Ho, Wo): cheap XLA-side ops ------
    need = ho1 * wp
    if P < need:
        out_flat = jnp.pad(out_flat, ((0, 0), (0, 0), (0, need - P)))
    out = out_flat[:, :, :need].reshape(N, Cout, ho1, wp)
    # TODO(synk): stride > 1 computes the dense stride-1 map in-kernel and
    # subsamples here (correct but wasteful); test config is stride=1.
    out = out[:, :, ::stride, ::stride][:, :, :ho, :wo]
    return out


def _reference(x, dw_w, dw_b, pw_w, pw_b, *, kernel_size, stride, padding):
    """Plain-JAX reference (grouped conv + 1x1 conv), NCHW."""
    Cin = x.shape[1]
    k = kernel_size
    dw = jnp.transpose(dw_w, (2, 0, 1)).reshape(Cin, 1, k, k)   # OIHW, groups=Cin
    out = lax.conv_general_dilated(
        x, dw, window_strides=(stride, stride),
        padding=[(padding, padding), (padding, padding)],
        dimension_numbers=("NCHW", "OIHW", "NCHW"),
        feature_group_count=Cin)
    out = out + dw_b[None, :, None, None]
    out = jnp.einsum("nchw,cd->ndhw", out, pw_w) + pw_b[None, :, None, None]
    return out


if __name__ == "__main__":
    # SeparableConv2D(in_channels=4, out_channels=8, kernel_size=3), stride=1, padding=0.
    N, Cin, H, W = 2, 4, 16, 16
    Cout, K, STRIDE, PAD = 8, 3, 1, 0

    key = jax.random.PRNGKey(0)
    kx, k1, k2, k3, k4 = jax.random.split(key, 5)

    # PyTorch-native NCHW input; no layout transposes needed.
    x = jax.random.normal(kx, (N, Cin, H, W), dtype=jnp.float32)

    # nn.Conv2d params: depthwise weight (Cin,1,K,K) stored as (K,K,Cin),
    # pointwise weight (Cout,Cin,1,1) stored as (Cin,Cout).
    dw_w = 0.1 * jax.random.normal(k1, (K, K, Cin), dtype=jnp.float32)
    dw_b = 0.1 * jax.random.normal(k2, (Cin,), dtype=jnp.float32)
    pw_w = 0.1 * jax.random.normal(k3, (Cin, Cout), dtype=jnp.float32)
    pw_b = 0.1 * jax.random.normal(k4, (Cout,), dtype=jnp.float32)

    out = separable_conv2d(x, dw_w, dw_b, pw_w, pw_b,
                           kernel_size=K, stride=STRIDE, padding=PAD)
    out = jax.block_until_ready(out)

    ref = _reference(x, dw_w, dw_b, pw_w, pw_b,
                     kernel_size=K, stride=STRIDE, padding=PAD)
    assert out.shape == (N, Cout, H - K + 1, W - K + 1), out.shape
    err = float(jnp.max(jnp.abs(out - ref)))
    assert jnp.allclose(out, ref, atol=1e-4, rtol=1e-4), err

    print("KERNEL_OK")
</pallas_src>

<mosaic_0001>
module attributes {stable_mosaic.version = 11 : i64} {
  func.func @_sepconv_kernel(%arg0: i32, %arg1: i32, %arg2: memref<1x8x256xf32, #tpu.memory_space<vmem>>, %arg3: memref<1x8x128xf32, #tpu.memory_space<vmem>>, %arg4: memref<8x72xf32, #tpu.memory_space<vmem>>, %arg5: memref<8x1xf32, #tpu.memory_space<vmem>>, %arg6: memref<1x8x256xf32, #tpu.memory_space<vmem>>) attributes {dimension_semantics = [#tpu.dimension_semantics<parallel>, #tpu.dimension_semantics<parallel>], iteration_bounds = array<i64: 2, 1>, scalar_prefetch = 0 : i64, scratch_operands = 0 : i64, tpu.core_type = #tpu.core_type<tc>, window_params = [{transform_indices = @transform_0, window_bounds = array<i64: 1, 8, 256>}, {transform_indices = @transform_1, window_bounds = array<i64: 1, 8, 128>}, {pipeline_mode = #tpu.pipeline_mode<synchronous>, transform_indices = @transform_2, window_bounds = array<i64: 8, 72>}, {pipeline_mode = #tpu.pipeline_mode<synchronous>, transform_indices = @transform_3, window_bounds = array<i64: 8, 1>}, {transform_indices = @transform_4, window_bounds = array<i64: 1, 8, 256>}]} {
    %c0 = arith.constant 0 : index
    %c0_0 = arith.constant 0 : index
    %c0_1 = arith.constant 0 : index
    %0 = vector.load %arg2[%c0, %c0_0, %c0_1] : memref<1x8x256xf32, #tpu.memory_space<vmem>>, vector<1x8x256xf32>
    %1 = vector.shape_cast %0 : vector<1x8x256xf32> to vector<8x256xf32>
    %c0_2 = arith.constant 0 : index
    %c0_3 = arith.constant 0 : index
    %c0_4 = arith.constant 0 : index
    %2 = vector.load %arg3[%c0_2, %c0_3, %c0_4] : memref<1x8x128xf32, #tpu.memory_space<vmem>>, vector<1x8x128xf32>
    %3 = vector.shape_cast %2 : vector<1x8x128xf32> to vector<8x128xf32>
    %4 = tpu.concatenate %1, %3 in 1 : vector<8x256xf32>, vector<8x128xf32> -> vector<8x384xf32>
    %5 = vector.extract_strided_slice %4 {offsets = [0, 0], sizes = [8, 256], strides = [1, 1]} : vector<8x384xf32> to vector<8x256xf32>
    %6 = vector.extract_strided_slice %4 {offsets = [0, 1], sizes = [8, 256], strides = [1, 1]} : vector<8x384xf32> to vector<8x256xf32>
    %7 = vector.extract_strided_slice %4 {offsets = [0, 2], sizes = [8, 256], strides = [1, 1]} : vector<8x384xf32> to vector<8x256xf32>
    %8 = vector.extract_strided_slice %4 {offsets = [0, 16], sizes = [8, 256], strides = [1, 1]} : vector<8x384xf32> to vector<8x256xf32>
    %9 = vector.extract_strided_slice %4 {offsets = [0, 17], sizes = [8, 256], strides = [1, 1]} : vector<8x384xf32> to vector<8x256xf32>
    %10 = vector.extract_strided_slice %4 {offsets = [0, 18], sizes = [8, 256], strides = [1, 1]} : vector<8x384xf32> to vector<8x256xf32>
    %11 = vector.extract_strided_slice %4 {offsets = [0, 32], sizes = [8, 256], strides = [1, 1]} : vector<8x384xf32> to vector<8x256xf32>
    %12 = vector.extract_strided_slice %4 {offsets = [0, 33], sizes = [8, 256], strides = [1, 1]} : vector<8x384xf32> to vector<8x256xf32>
    %13 = vector.extract_strided_slice %4 {offsets = [0, 34], sizes = [8, 256], strides = [1, 1]} : vector<8x384xf32> to vector<8x256xf32>
    %14 = tpu.concatenate %5, %6, %7, %8, %9, %10, %11, %12, %13 in 0 : vector<8x256xf32>, vector<8x256xf32>, vector<8x256xf32>, vector<8x256xf32>, vector<8x256xf32>, vector<8x256xf32>, vector<8x256xf32>, vector<8x256xf32>, vector<8x256xf32> -> vector<72x256xf32>
    %c0_5 = arith.constant 0 : index
    %c0_6 = arith.constant 0 : index
    %15 = vector.load %arg4[%c0_5, %c0_6] : memref<8x72xf32, #tpu.memory_space<vmem>>, vector<8x72xf32>
    %cst = arith.constant dense<0.000000e+00> : vector<8x256xf32>
    %16 = tpu.matmul %15, %14, %cst {dimension_numbers = #tpu.dot_dimension_numbers<[1], [0], [0], [1], [0, 0, 1, 1], [], []>} : vector<8x72xf32>, vector<72x256xf32>, vector<8x256xf32> -> vector<8x256xf32>
    %c0_7 = arith.constant 0 : index
    %c0_8 = arith.constant 0 : index
    %17 = vector.load %arg5[%c0_7, %c0_8] : memref<8x1xf32, #tpu.memory_space<vmem>>, vector<8x1xf32>
    %18 = vector.broadcast %17 : vector<8x1xf32> to vector<8x256xf32>
    %19 = arith.addf %16, %18 : vector<8x256xf32>
    %c0_9 = arith.constant 0 : index
    %c0_10 = arith.constant 0 : index
    %c0_11 = arith.constant 0 : index
    %20 = vector.load %arg6[%c0_9, %c0_10, %c0_11] : memref<1x8x256xf32, #tpu.memory_space<vmem>>, vector<1x8x256xf32>
    %21 = vector.shape_cast %20 : vector<1x8x256xf32> to vector<8x256xf32>
    %22 = vector.shape_cast %19 : vector<8x256xf32> to vector<1x8x256xf32>
    tpu.vector_store %arg6[%c0_9, %c0_10, %c0_11], %22 {strides = array<i32>} : memref<1x8x256xf32, #tpu.memory_space<vmem>>, vector<1x8x256xf32>,
    return
  }
  func.func @transform_0(%arg0: i32, %arg1: i32) -> (i32, i32, i32) {
    %c0_i32 = arith.constant 0 : i32
    %c0_i32_0 = arith.constant 0 : i32
    return %arg0, %c0_i32, %arg1 : i32, i32, i32
  }
  func.func @transform_1(%arg0: i32, %arg1: i32) -> (i32, i32, i32) {
    %c1_i32 = arith.constant 1 : i32
    %0 = arith.addi %arg1, %c1_i32 : i32
    %c2_i32 = arith.constant 2 : i32
    %1 = arith.muli %0, %c2_i32 : i32
    %c0_i32 = arith.constant 0 : i32
    %c0_i32_0 = arith.constant 0 : i32
    return %arg0, %c0_i32, %1 : i32, i32, i32
  }
  func.func @transform_2(%arg0: i32, %arg1: i32) -> (i32, i32) {
    %c0_i32 = arith.constant 0 : i32
    %c0_i32_0 = arith.constant 0 : i32
    %c0_i32_1 = arith.constant 0 : i32
    return %c0_i32, %c0_i32_0 : i32, i32
  }
  func.func @transform_3(%arg0: i32, %arg1: i32) -> (i32, i32) {
    %c0_i32 = arith.constant 0 : i32
    %c0_i32_0 = arith.constant 0 : i32
    %c0_i32_1 = arith.constant 0 : i32
    return %c0_i32, %c0_i32_0 : i32, i32
  }
  func.func @transform_4(%arg0: i32, %arg1: i32) -> (i32, i32, i32) {
    %c0_i32 = arith.constant 0 : i32
    %c0_i32_0 = arith.constant 0 : i32
    return %arg0, %c0_i32, %arg1 : i32, i32, i32
  }
}

</mosaic_0001>

<llo_original>
// kernel: tpu_custom_call.1
$region0: #{tpu_custom_call.1}
  #allocation0 [shape = 'u32[]', space=smem, size = 0x4, offset = 0x4, fixed_abs, tag = 'smem constant byte address 0x4 - core index']
  #allocation1 [shape = 'u32[144,128]{1,0:T(1,128)}', space=vmem, size = 0x12000, scoped, tag = 'internal scratch']
  %s0 = inlined_call_operand.hbm [shape: f32[2,8,384], index: 0, kind: input, shape index: {}]
  %s1 = inlined_call_operand.hbm [shape: f32[2,8,384], index: 1, kind: input, shape index: {}]
  %s2 = inlined_call_operand.vmem [shape: f32[8,72], index: 2, kind: input, shape index: {}]
  %s3 = inlined_call_operand.vmem [shape: f32[8,1], index: 3, kind: input, shape index: {}]
  %s4 = inlined_call_operand.hbm [shape: f32[2,8,256], index: 4, kind: output, shape index: {}]
  %s5 = sld [smem:[#allocation0]]
  $region57: #{tpu_custom_call.1} parent=0
    _
  %s7 = ssub.s32 1, %s5
  %s8 = scalar_select 0, %s7, %s5
  $region1: #{tpu_custom_call.1} parent=0
    #allocation2 [shape = 'u8[16384]{0}', space=vmem, size = 0x4000, scoped, tag = 'input window, operand 0']
    #allocation3 [shape = 's32[2]{0}', space=sflag, size = 0x8, scoped, tag = 'scoped memory for tpu_custom_call.1']
    #allocation4 [shape = 's32[2]{0}', space=sflag, size = 0x8, scoped, tag = 'scoped memory for tpu_custom_call.1']
    #allocation5 [shape = 'u8[8192]{0}', space=vmem, size = 0x2000, scoped, tag = 'input window, operand 1']
    #allocation6 [shape = 's32[2]{0}', space=sflag, size = 0x8, scoped, tag = 'scoped memory for tpu_custom_call.1']
    #allocation7 [shape = 'u8[16384]{0}', space=vmem, size = 0x4000, scoped, tag = 'output window, operand 0']
    %9 = vsyncpa [#allocation3], 0
    %s10 = scalar_lea.sflag [#allocation3], 1
    %11 = vsyncpa %s10, 0
    %12 = vsyncpa [#allocation6], 0
    %s13 = scalar_lea.sflag [#allocation6], 1
    %14 = vsyncpa %s13, 0
    %15 = vsyncpa [#allocation4], 0
    %s16 = scalar_lea.sflag [#allocation4], 1
    %17 = vsyncpa %s16, 0
    loop: start=0, step=1, limit=4
    $region2: #{tpu_custom_call.1} parent=1 // loop_pre_header
      _
    $region3: #{tpu_custom_call.1} parent=1 // loop_header
      %s19 = sphi 0, %s23
      %p20 = scmp.ge.s32.totalorder %s19, 4
      %s26 = sphi 0, %s38
      %s27 = sphi 0, %s34
      %s28 = sphi 0, %s26
      %s29 = sphi 0, %s27
      %s30 = sphi 0, %s28
      %s31 = sphi 0, %s29
      %s43 = sphi 0, %s45
      %s46 = sphi 0, %s43
      %s47 = sphi 0, %s46
      %s63 = sphi 0, %s47
      %s75 = sphi 0, %s77
      %s78 = sphi 0, %s75
      %s79 = sphi 0, %s78
      %s95 = sphi 0, %s79
      %s99 = sphi 0, %s99
      %s101 = sphi 0, %s99
      %s102 = sphi 0, %s101
      %s116 = sphi 0, %s102
      %s120 = sphi 0, %s120
      %s122 = sphi 0, %s120
      %s123 = sphi 0, %s122
      %s137 = sphi 0, %s123
      %s145 = sphi 0, %s147
      %s148 = sphi 0, %s145
      %s149 = sphi 0, %s148
      %s165 = sphi 0, %s149
    $region4: #{tpu_custom_call.1} parent=1 // loop_header_branch
      %22 = sbr.rel (%p20) target = $region8
    $region5: #{tpu_custom_call.1} parent=1 // loop_body
      %s24 = ssub.s32 %s19, 1
      %s25 = ssub.s32 %s19, 2
      %s32 = sadd.s32 1, %s27
      %p33 = scmp.ge.s32.totalorder %s32, 1
      %s34 = scalar_select %p33, 0, %s32
      %s35 = sadd.s32 1, %s26
      %s36 = scalar_select %p33, %s35, %s26
      %p37 = scmp.ge.s32.totalorder %s36, 2
      %s38 = scalar_select %p37, 0, %s36
      %s39 = ssub.s32 %s26, %s38
      %s40 = ssub.s32 %s27, %s34
      %s41 = sor.u32 %s39, %s40
      %p42 = scmp.eq.s32.totalorder %s41, 0
      %s44 = sadd.s32 %s43, 1
      %s45 = scalar_select %p42, %s43, %s44
      %p48 = pneg %p42
      %p49 = scmp.eq.s32.totalorder %s19, 1
      %p50 = por %p48, %p49
      %p51 = scmp.ne.s32.totalorder %s43, %s46
      %p52 = scmp.eq.s32.totalorder %s19, 0
      %p53 = por %p51, %p52
      %p54 = scmp.ne.s32.totalorder %s43, %s46
      %p55 = scmp.eq.s32.totalorder %s24, 1
      %p56 = por %p54, %p55
      %p57 = scmp.ne.s32.totalorder %s46, %s47
      %p58 = scmp.eq.s32.totalorder %s24, 0
      %p59 = por %p57, %p58
      %p60 = scmp.ne.s32.totalorder %s46, %s47
      %p61 = scmp.eq.s32.totalorder %s25, 1
      %p62 = por %p60, %p61
      %p64 = scmp.ne.s32.totalorder %s47, %s63
      %p65 = scmp.eq.s32.totalorder %s25, 0
      %p66 = por %p64, %p65
      %s67 = sadd.s32 %s27, 1
      %s68 = smul.u32 %s67, 2
      %s69 = sadd.s32 %s34, 1
      %s70 = smul.u32 %s69, 2
      %s71 = ssub.s32 %s26, %s38
      %s72 = ssub.s32 %s68, %s70
      %s73 = sor.u32 %s71, %s72
      %p74 = scmp.eq.s32.totalorder %s73, 0
      %s76 = sadd.s32 %s75, 1
      %s77 = scalar_select %p74, %s75, %s76
      %p80 = pneg %p74
      %p81 = scmp.eq.s32.totalorder %s19, 1
      %p82 = por %p80, %p81
      %p83 = scmp.ne.s32.totalorder %s75, %s78
      %p84 = scmp.eq.s32.totalorder %s19, 0
      %p85 = por %p83, %p84
      %p86 = scmp.ne.s32.totalorder %s75, %s78
      %p87 = scmp.eq.s32.totalorder %s24, 1
      %p88 = por %p86, %p87
      %p89 = scmp.ne.s32.totalorder %s78, %s79
      %p90 = scmp.eq.s32.totalorder %s24, 0
      %p91 = por %p89, %p90
      %p92 = scmp.ne.s32.totalorder %s78, %s79
      %p93 = scmp.eq.s32.totalorder %s25, 1
      %p94 = por %p92, %p93
      %p96 = scmp.ne.s32.totalorder %s79, %s95
      %p97 = scmp.eq.s32.totalorder %s25, 0
      %p98 = por %p96, %p97
      %s100 = sadd.s32 %s99, 1
      %p103 = scmp.eq.s32.totalorder %s19, 1
      %p104 = scmp.ne.s32.totalorder %s99, %s101
      %p105 = scmp.eq.s32.totalorder %s19, 0
      %p106 = por %p104, %p105
      %p107 = scmp.ne.s32.totalorder %s99, %s101
      %p108 = scmp.eq.s32.totalorder %s24, 1
      %p109 = por %p107, %p108
      %p110 = scmp.ne.s32.totalorder %s101, %s102
      %p111 = scmp.eq.s32.totalorder %s24, 0
      %p112 = por %p110, %p111
      %p113 = scmp.ne.s32.totalorder %s101, %s102
      %p114 = scmp.eq.s32.totalorder %s25, 1
      %p115 = por %p113, %p114
      %p117 = scmp.ne.s32.totalorder %s102, %s116
      %p118 = scmp.eq.s32.totalorder %s25, 0
      %p119 = por %p117, %p118
      %s121 = sadd.s32 %s120, 1
      %p124 = scmp.eq.s32.totalorder %s19, 1
      %p125 = scmp.ne.s32.totalorder %s120, %s122
      %p126 = scmp.eq.s32.totalorder %s19, 0
      %p127 = por %p125, %p126
      %p128 = scmp.ne.s32.totalorder %s120, %s122
      %p129 = scmp.eq.s32.totalorder %s24, 1
      %p130 = por %p128, %p129
      %p131 = scmp.ne.s32.totalorder %s122, %s123
      %p132 = scmp.eq.s32.totalorder %s24, 0
      %p133 = por %p131, %p132
      %p134 = scmp.ne.s32.totalorder %s122, %s123
      %p135 = scmp.eq.s32.totalorder %s25, 1
      %p136 = por %p134, %p135
      %p138 = scmp.ne.s32.totalorder %s123, %s137
      %p139 = scmp.eq.s32.totalorder %s25, 0
      %p140 = por %p138, %p139
      %s141 = ssub.s32 %s26, %s38
      %s142 = ssub.s32 %s27, %s34
      %s143 = sor.u32 %s141, %s142
      %p144 = scmp.eq.s32.totalorder %s143, 0
      %s146 = sadd.s32 %s145, 1
      %s147 = scalar_select %p144, %s145, %s146
      %p150 = pneg %p144
      %p151 = scmp.eq.s32.totalorder %s19, 1
      %p152 = por %p150, %p151
      %p153 = scmp.ne.s32.totalorder %s145, %s148
      %p154 = scmp.eq.s32.totalorder %s19, 0
      %p155 = por %p153, %p154
      %p156 = scmp.ne.s32.totalorder %s145, %s148
      %p157 = scmp.eq.s32.totalorder %s24, 1
      %p158 = por %p156, %p157
      %p159 = scmp.ne.s32.totalorder %s148, %s149
      %p160 = scmp.eq.s32.totalorder %s24, 0
      %p161 = por %p159, %p160
      %p162 = scmp.ne.s32.totalorder %s148, %s149
      %p163 = scmp.eq.s32.totalorder %s25, 1
      %p164 = por %p162, %p163
      %p166 = scmp.ne.s32.totalorder %s149, %s165
      %p167 = scmp.eq.s32.totalorder %s25, 0
      %p168 = por %p166, %p167
      %p169 = scmp.le.s32.totalorder 1, %s19
      %p170 = scmp.lt.s32.totalorder %s19, 3
      %p171 = pnand %p169, %p170
      %p172 = pneg %p171
      // Predicated region
      $region9: #{tpu_custom_call.1} parent=5 // pred_check
        _
      $region10: #{tpu_custom_call.1} parent=5 // pred_check_branch
        %174 = sbr.rel (%p171) target = $region12
      $region11: #{tpu_custom_call.1} parent=5 // pred_region
        %s175 = ssub.s32 %s19, 1
        // Predicated region
        $region13: #{tpu_custom_call.1} parent=11 // pred_check
          %p176 = pneg %p112
        $region14: #{tpu_custom_call.1} parent=11 // pred_check_branch
          %178 = sbr.rel (%p176) target = $region16
        $region15: #{tpu_custom_call.1} parent=11 // pred_region
          _
        $region16: #{tpu_custom_call.1} parent=11 // pred_fallthru
          _
        // Predicated region
        $region17: #{tpu_custom_call.1} parent=11 // pred_check
          %p179 = pneg %p133
        $region18: #{tpu_custom_call.1} parent=11 // pred_check_branch
          %181 = sbr.rel (%p179) target = $region20
        $region19: #{tpu_custom_call.1} parent=11 // pred_region
          _
        $region20: #{tpu_custom_call.1} parent=11 // pred_fallthru
          _
      $region12: #{tpu_custom_call.1} parent=5 // pred_fallthru
        _
      %p182 = scmp.lt.s32.totalorder %s19, 2
      // Predicated region
      $region21: #{tpu_custom_call.1} parent=5 // pred_check
        %p183 = pneg %p182
      $region22: #{tpu_custom_call.1} parent=5 // pred_check_branch
        %185 = sbr.rel (%p183) target = $region24
      $region23: #{tpu_custom_call.1} parent=5 // pred_region
        // Predicated region
        $region25: #{tpu_custom_call.1} parent=23 // pred_check
          %p186 = pneg %p53
        $region26: #{tpu_custom_call.1} parent=23 // pred_check_branch
          %188 = sbr.rel (%p186) target = $region28
        $region27: #{tpu_custom_call.1} parent=23 // pred_region
          %s189 = sand.u32 %s43, 1
          %s190 = scalar_lea.sflag [#allocation3], %s189
          %s191 = sand.u32 %s43, 1
          %s192 = smul.addr %s191, 16
          %s193 = scalar_lea.vmem [#allocation2], %s192
          %s194 = smul.u32 2, %s27
          %s195 = ssub.s32 3, %s194
          %p196 = scmp.lt.s32.totalorder %s195, 2
          %s197 = scalar_select %p196, %s195, 2
          %s198 = smul.u32 128, %s197
          %s200 = ssub.s32 256, %s198
          %201 = vsyncadd %s190, %s200
          %p202 = scmp.ne.s32.totalorder 0, %s198
          %s203 = smul.addr %s26, 3
          %s204 = sadd.s32 %s194, %s203
          %s205 = smul.addr %s204, 128
          %s206 = scalar_lea.hbm %s0, %s205
          %s207 = smul.u32 %s197, 8
          %s208 = sshll.u32 %s207, 4
          %s209 = sshll.u32 %s193, 4
          %s210 = int_to_ptr.vmem [resolvable:$true] %s209
          %212 = dma.hbm_to_vmem [thread:$0]  (%p202), %s206, %s208, %s210, %s190
        $region28: #{tpu_custom_call.1} parent=23 // pred_fallthru
          _
        // Predicated region
        $region29: #{tpu_custom_call.1} parent=23 // pred_check
          %p213 = pneg %p85
        $region30: #{tpu_custom_call.1} parent=23 // pred_check_branch
          %215 = sbr.rel (%p213) target = $region32
        $region31: #{tpu_custom_call.1} parent=23 // pred_region
          %s216 = sand.u32 %s75, 1
          %s217 = scalar_lea.sflag [#allocation6], %s216
          %s218 = sand.u32 %s75, 1
          %s219 = smul.addr %s218, 8
          %s220 = scalar_lea.vmem [#allocation5], %s219
          %s221 = sadd.s32 %s27, 1
          %s222 = smul.u32 %s221, 2
          %s224 = ssub.s32 128, 128
          %225 = vsyncadd %s217, %s224
          %s226 = smul.addr %s26, 3
          %s227 = sadd.s32 %s222, %s226
          %s228 = smul.addr %s227, 128
          %s229 = scalar_lea.hbm %s1, %s228
          %s231 = sshll.u32 %s220, 4
          %s232 = int_to_ptr.vmem [resolvable:$true] %s231
          %234 = dma.hbm_to_vmem [thread:$0]  %s229, 128, %s232, %s217
        $region32: #{tpu_custom_call.1} parent=23 // pred_fallthru
          _
      $region24: #{tpu_custom_call.1} parent=5 // pred_fallthru
        _
      %p235 = scmp.le.s32.totalorder 1, %s19
      %p236 = scmp.lt.s32.totalorder %s19, 3
      %p237 = pnand %p235, %p236
      %p238 = pneg %p237
      // Predicated region
      $region33: #{tpu_custom_call.1} parent=5 // pred_check
        _
      $region34: #{tpu_custom_call.1} parent=5 // pred_check_branch
        %240 = sbr.rel (%p237) target = $region36
      $region35: #{tpu_custom_call.1} parent=5 // pred_region
        %s241 = ssub.s32 %s19, 1
        %s242 = sand.u32 %s46, 1
        %s243 = scalar_lea.sflag [#allocation3], %s242
        %s244 = sand.u32 %s46, 1
        %s245 = smul.addr %s244, 16
        %s246 = scalar_lea.vmem [#allocation2], %s245
        // Predicated region
        $region37: #{tpu_custom_call.1} parent=35 // pred_check
          %p247 = pneg %p59
        $region38: #{tpu_custom_call.1} parent=35 // pred_check_branch
          %249 = sbr.rel (%p247) target = $region40
        $region39: #{tpu_custom_call.1} parent=35 // pred_region
          %250 = dma.done %s243, 256
        $region40: #{tpu_custom_call.1} parent=35 // pred_fallthru
          _
        %s251 = sand.u32 %s78, 1
        %s252 = scalar_lea.sflag [#allocation6], %s251
        %s253 = sand.u32 %s78, 1
        %s254 = smul.addr %s253, 8
        %s255 = scalar_lea.vmem [#allocation5], %s254
        // Predicated region
        $region41: #{tpu_custom_call.1} parent=35 // pred_check
          %p256 = pneg %p91
        $region42: #{tpu_custom_call.1} parent=35 // pred_check_branch
          %258 = sbr.rel (%p256) target = $region44
        $region43: #{tpu_custom_call.1} parent=35 // pred_region
          %259 = dma.done %s252, 128
        $region44: #{tpu_custom_call.1} parent=35 // pred_fallthru
          _
        %s260 = sand.u32 %s46, 1
        %s261 = scalar_lea.sflag [#allocation3], %s260
        %s262 = sand.u32 %s46, 1
        %s263 = smul.addr %s262, 16
        %s264 = scalar_lea.vmem [#allocation2], %s263
        %p265 = pneg %p59
        %p266 = pneg %p56
        %s267 = sand.u32 %s78, 1
        %s268 = scalar_lea.sflag [#allocation6], %s267
        %s269 = sand.u32 %s78, 1
        %s270 = smul.addr %s269, 8
        %s271 = scalar_lea.vmem [#allocation5], %s270
        %p272 = pneg %p91
        %p273 = pneg %p88
        %p274 = pneg %p112
        %p275 = pneg %p109
        %p276 = pneg %p133
        %p277 = pneg %p130
        %p278 = pneg %p161
        %p279 = pneg %p158
        %s280 = sand.u32 %s148, 1
        %s281 = scalar_lea.sflag [#allocation4], %s280
        %s282 = sand.u32 %s148, 1
        %s283 = smul.addr %s282, 16
        %s284 = scalar_lea.vmem [#allocation7], %s283
        %s285 = smul.u32 2, %s29
        %s286 = ssub.s32 3, %s285
        %p287 = scmp.lt.s32.totalorder %s286, 2
        %s288 = scalar_select %p287, %s286, 2
        %s289 = smul.u32 128, %s288
        %s290 = sadd.s32 %s29, 1
        %s291 = smul.u32 %s290, 2
        %s292 = smul.u32 2, %s29
        %v293 = vld [vmem:[%s246] sm:$0xff]
        %v294 = vld [vmem:[%s246 + $0x8] sm:$0xff]
        %v295 = vld [vmem:[%s255] sm:$0xff]
        %299 = vrot.lane.b32.xlu0 %v293, 127
        %v300 = vpop.permute.xlu0 %299
        %301 = vrot.lane.b32.xlu0 %v294, 127
        %v302 = vpop.permute.xlu0 %301
        %303 = vrot.lane.b32.xlu0 %v295, 127
        %v304 = vpop.permute.xlu0 %303
        %vm305 = vcmask 1039360
        %v306 = vsel %vm305, %v300, %v302
        %v307 = vsel %vm305, %v302, %v304
        %310 = vrot.lane.b32.xlu0 %v293, 126
        %v311 = vpop.permute.xlu0 %310
        %312 = vrot.lane.b32.xlu0 %v294, 126
        %v313 = vpop.permute.xlu0 %312
        %314 = vrot.lane.b32.xlu0 %v295, 126
        %v315 = vpop.permute.xlu0 %314
        %vm316 = vcmask 1031168
        %v317 = vsel %vm316, %v311, %v313
        %v318 = vsel %vm316, %v313, %v315
        %321 = vrot.lane.b32.xlu0 %v293, 112
        %v322 = vpop.permute.xlu0 %321
        %323 = vrot.lane.b32.xlu0 %v294, 112
        %v324 = vpop.permute.xlu0 %323
        %325 = vrot.lane.b32.xlu0 %v295, 112
        %v326 = vpop.permute.xlu0 %325
        %vm327 = vcmask 916480
        %v328 = vsel %vm327, %v322, %v324
        %v329 = vsel %vm327, %v324, %v326
        %332 = vrot.lane.b32.xlu0 %v293, 111
        %v333 = vpop.permute.xlu0 %332
        %334 = vrot.lane.b32.xlu0 %v294, 111
        %v335 = vpop.permute.xlu0 %334
        %336 = vrot.lane.b32.xlu0 %v295, 111
        %v337 = vpop.permute.xlu0 %336
        %vm338 = vcmask 908288
        %v339 = vsel %vm338, %v333, %v335
        %v340 = vsel %vm338, %v335, %v337
        %343 = vrot.lane.b32.xlu0 %v293, 110
        %v344 = vpop.permute.xlu0 %343
        %345 = vrot.lane.b32.xlu0 %v294, 110
        %v346 = vpop.permute.xlu0 %345
        %347 = vrot.lane.b32.xlu0 %v295, 110
        %v348 = vpop.permute.xlu0 %347
        %vm349 = vcmask 900096
        %v350 = vsel %vm349, %v344, %v346
        %v351 = vsel %vm349, %v346, %v348
        %354 = vrot.lane.b32.xlu0 %v293, 96
        %v355 = vpop.permute.xlu0 %354
        %356 = vrot.lane.b32.xlu0 %v294, 96
        %v357 = vpop.permute.xlu0 %356
        %358 = vrot.lane.b32.xlu0 %v295, 96
        %v359 = vpop.permute.xlu0 %358
        %vm360 = vcmask 785408
        %v361 = vsel %vm360, %v355, %v357
        %v362 = vsel %vm360, %v357, %v359
        %365 = vrot.lane.b32.xlu0 %v293, 95
        %v366 = vpop.permute.xlu0 %365
        %367 = vrot.lane.b32.xlu0 %v294, 95
        %v368 = vpop.permute.xlu0 %367
        %369 = vrot.lane.b32.xlu0 %v295, 95
        %v370 = vpop.permute.xlu0 %369
        %vm371 = vcmask 777216
        %v372 = vsel %vm371, %v366, %v368
        %v373 = vsel %vm371, %v368, %v370
        %376 = vrot.lane.b32.xlu0 %v293, 94
        %v377 = vpop.permute.xlu0 %376
        %378 = vrot.lane.b32.xlu0 %v294, 94
        %v379 = vpop.permute.xlu0 %378
        %380 = vrot.lane.b32.xlu0 %v295, 94
        %v381 = vpop.permute.xlu0 %380
        %vm382 = vcmask 769024
        %v383 = vsel %vm382, %v377, %v379
        %v384 = vsel %vm382, %v379, %v381
        %v387 = vld [vmem:[%s2] sm:$0xff]
        %v388 = vld [vmem:[%s3] sm:$0xff]
        %390 = vset.pattern.permute.xlu0 0
        %391 = vperm.xlu0 %390, %v388
        %v392 = vpop.permute.xlu0 %391
        %vm394 = vcmask 588800
        %v396 = vsel %vm394, %v387, 0
        %398 = vmatprep.subr.mxu0 %v294
        %399 = vmatpush1.msra.mxu0 %v293
        %400 = vmatprep.subr.mxu0 %v307
        %401 = vmatpush1.msra.mxu0 %v306
        %402 = vmatprep.subr.mxu0 %v318
        %403 = vmatpush1.msra.mxu0 %v317
        %404 = vmatprep.subr.mxu0 %v329
        %405 = vmatpush1.msra.mxu0 %v328
        %406 = vmatprep.subr.mxu0 %v340
        %407 = vmatpush1.msra.mxu0 %v339
        %408 = vmatprep.subr.mxu0 %v351
        %409 = vmatpush1.msra.mxu0 %v350
        %410 = vmatprep.subr.mxu0 %v362
        %411 = vmatpush1.msra.mxu0 %v361
        %412 = vmatprep.subr.mxu0 %v373
        %413 = vmatpush1.msra.mxu0 %v372
        %414 = vmatprep.subr.mxu0 %v384
        %415 = vmatpush1.msra.mxu0 %v383
        %416 = vmatprep.subr.mxu0 0.0
        %417 = vmatpush1.msra.mxu0 0.0
        %418 = vmatprep.subr.mxu0 0.0
        %419 = vmatpush1.msra.mxu0 0.0
        %420 = vmatprep.subr.mxu0 0.0
        %421 = vmatpush1.msra.mxu0 0.0
        %422 = vmatprep.subr.mxu0 0.0
        %423 = vmatpush1.msra.mxu0 0.0
        %424 = vmatprep.subr.mxu0 0.0
        %425 = vmatpush1.msra.mxu0 0.0
        %426 = vmatprep.subr.mxu0 0.0
        %427 = vmatpush1.msra.mxu0 0.0
        %428 = vmatprep.subr.mxu0 0.0
        %429 = vmatpush1.msra.mxu0 0.0
        %430 = vmatprep.subr.mxu0 0.0
        %431 = vmatpush1.msra.mxu0 0.0
        %432 = vmatprep.subr.mxu0 0.0
        %433 = vmatpush1.msra.mxu0 0.0
        %434 = vmatprep.subr.mxu0 0.0
        %435 = vmatpush1.msra.mxu0 0.0
        %436 = vmatprep.subr.mxu0 0.0
        %437 = vmatpush1.msra.mxu0 0.0
        %438 = vmatprep.subr.mxu0 0.0
        %439 = vmatpush1.msra.mxu0 0.0
        %440 = vmatprep.subr.mxu0 0.0
        %441 = vmatpush1.msra.mxu0 0.0
        %442 = vmatprep.subr.mxu0 0.0
        %443 = vmatpush1.msra.mxu0 0.0
        %444 = vmatprep.subr.mxu0 0.0
        %445 = vmatpush1.msra.mxu0 0.0
        %446 = vmatprep.subr.mxu0 0.0
        %447 = vmatpush1.msra.mxu0 0.0
        %448 = vmatprep.subr.mxu0 0.0
        %449 = vmatpush1.msra.mxu0 0.0
        %450 = vmatprep.subr.mxu0 0.0
        %451 = vmatpush1.msra.mxu0 0.0
        %452 = vmatprep.subr.mxu0 0.0
        %453 = vmatpush1.msra.mxu0 0.0
        %454 = vmatprep.subr.mxu0 0.0
        %455 = vmatpush1.msra.mxu0 0.0
        %456 = vmatprep.subr.mxu0 0.0
        %457 = vmatpush1.msra.mxu0 0.0
        %458 = vmatprep.subr.mxu0 0.0
        %459 = vmatpush1.msra.mxu0 0.0
        %460 = vmatprep.subr.mxu0 0.0
        %461 = vmatpush1.msra.mxu0 0.0
        %462 = vmatprep.mubr.f32.mxu0 0.0
        %463 = vmatmul.mubr.f32.gmra.mrb[0].mxu0 %v396
        %v464 = vpop.f32.mrb[0].mxu0
        %v465 = vadd.f32 %v392, %v464
        %v466 = vpop.f32.mrb[0].mxu0
        %v467 = vadd.f32 %v392, %v466
        %468 = vdwg.mxu0
        %469 = vst [vmem:[%s284] sm:$0xff] %v465
        %470 = vst [vmem:[%s284 + $0x8] sm:$0xff] %v467
        %s471 = sand.u32 %s148, 1
        %s472 = scalar_lea.sflag [#allocation4], %s471
        %s473 = sand.u32 %s148, 1
        %s474 = smul.addr %s473, 16
        %s475 = scalar_lea.vmem [#allocation7], %s474
        // Predicated region
        $region45: #{tpu_custom_call.1} parent=35 // pred_check
          %p476 = pneg %p158
        $region46: #{tpu_custom_call.1} parent=35 // pred_check_branch
          %478 = sbr.rel (%p476) target = $region48
        $region47: #{tpu_custom_call.1} parent=35 // pred_region
          %s479 = smul.u32 2, %s29
          %s481 = ssub.s32 256, 256
          %482 = vsyncadd %s472, %s481
          %s483 = smul.addr %s28, 2
          %s484 = sadd.s32 %s479, %s483
          %s485 = smul.addr %s484, 128
          %s486 = scalar_lea.hbm %s4, %s485
          %s488 = sshll.u32 %s475, 4
          %s489 = int_to_ptr.vmem [resolvable:$true] %s488
          %491 = dma.vmem_to_hbm [thread:$0]  %s489, 256, %s486, %s472
        $region48: #{tpu_custom_call.1} parent=35 // pred_fallthru
          _
      $region36: #{tpu_custom_call.1} parent=5 // pred_fallthru
        _
      %p492 = scmp.le.s32.totalorder 2, %s19
      // Predicated region
      $region49: #{tpu_custom_call.1} parent=5 // pred_check
        %p493 = pneg %p492
      $region50: #{tpu_custom_call.1} parent=5 // pred_check_branch
        %495 = sbr.rel (%p493) target = $region52
      $region51: #{tpu_custom_call.1} parent=5 // pred_region
        %s496 = ssub.s32 %s19, 2
        // Predicated region
        $region53: #{tpu_custom_call.1} parent=51 // pred_check
          %p497 = pneg %p164
        $region54: #{tpu_custom_call.1} parent=51 // pred_check_branch
          %499 = sbr.rel (%p497) target = $region56
        $region55: #{tpu_custom_call.1} parent=51 // pred_region
          %s500 = sand.u32 %s149, 1
          %s501 = scalar_lea.sflag [#allocation4], %s500
          %s502 = sand.u32 %s149, 1
          %s503 = smul.addr %s502, 16
          %s504 = scalar_lea.vmem [#allocation7], %s503
          %505 = dma.done %s501, 256
        $region56: #{tpu_custom_call.1} parent=51 // pred_fallthru
          _
      $region52: #{tpu_custom_call.1} parent=5 // pred_fallthru
        _
    $region6: #{tpu_custom_call.1} parent=1 // loop_footer
      %s23 = sadd.s32 1, %s19
    $region7: #{tpu_custom_call.1} parent=1 // loop_footer_branch
      %18 = sbr.rel target = $region3
    $region8: #{tpu_custom_call.1} parent=1 // loop_exit
      _
    %506 = vsyncpa [#allocation3], 1
    %s507 = scalar_lea.sflag [#allocation3], 1
    %508 = vsyncpa %s507, 1
    %509 = vsyncpa [#allocation6], 1
    %s510 = scalar_lea.sflag [#allocation6], 1
    %511 = vsyncpa %s510, 1
    %512 = vsyncpa [#allocation4], 1
    %s513 = scalar_lea.sflag [#allocation4], 1
    %514 = vsyncpa %s513, 1

</llo_original>
